<compile_context>
chip_gen: v6e
topology: v6e:2x2x1
jax: 0.10.0
libtpu: 0.0.40
codegen_flags: <defaults>
</compile_context>

<pallas_src>
import jax
import jax.numpy as jnp
from jax.experimental import pallas as pl
from jax.experimental.pallas import tpu as pltpu


def _mdecoder_scale_kernel(x_ref, w_ref, b_ref, scale_ref):
    # x_ref:       [block_rows, C] f32 tile in VMEM (lane-dense)
    # w_ref/b_ref: Linear(1,1) weight / bias scalars in SMEM
    # Linear(1,1): y = x * W[0,0] + b[0];  scale = exp(y)  (exp runs on the EUP)
    scale_ref[...] = jnp.exp(x_ref[...] * w_ref[0] + b_ref[0])


def _pick_block_rows(rows, max_block_rows):
    """Block height: <= max_block_rows, multiple of 8, and >= 2 grid steps."""
    if rows <= 8:
        return rows  # single full-array block (block_shape == full dims is OK)
    # Aim for ~4 grid steps so v7x can shard across its 2 TensorCores and the
    # pipeline has DMA-in / compute / DMA-out overlap, without shrinking blocks
    # below what keeps us near the HBM roofline.
    quarter = max(8, (rows // 4) // 8 * 8)
    return max(8, min(max_block_rows, quarter))


def _pick_layout(total, max_block_rows):
    """Choose a lane-dense [rows, C] layout, pad amount, and block height."""
    # Prefer a lane width that divides `total` exactly -> zero-copy wrapper.
    for c in (512, 256, 128):
        if total % c == 0:
            pad = 0
            break
    else:
        c = 512 if total >= (1 << 20) else 128
        pad = (-total) % c
    rows = (total + pad) // c
    block_rows = _pick_block_rows(rows, max_block_rows)
    return rows, c, pad, block_rows


def mdecoder_forward(x, w, b, *, max_block_rows=2048, min_pallas_elems=1 << 18,
                     force_pallas=False):
    """x: any shape (PyTorch layout is [..., 1]); w, b: Linear(1,1) params.

    Returns (pmx_mean, pmx_scale) with pmx_mean == x and
    pmx_scale == exp(x * w + b), both shaped like x (scale in float32).
    """
    orig_shape = x.shape
    total = int(x.size)

    w_f32 = jnp.asarray(w, jnp.float32)
    b_f32 = jnp.asarray(b, jnp.float32)

    pmx_mean = x  # passthrough: no HBM round-trip through the kernel

    if total == 0 or (total < min_pallas_elems and not force_pallas):
        # Tiny tensors: Pallas launch overhead + layout plumbing dominates;
        # XLA fuses mul+add+exp into one elementwise kernel with no copies.
        pmx_scale = jnp.exp(x.astype(jnp.float32) * w_f32 + b_f32)
        return pmx_mean, pmx_scale

    rows, c, pad, block_rows = _pick_layout(total, max_block_rows)

    flat = jnp.ravel(x).astype(jnp.float32)
    if pad:
        flat = jnp.pad(flat, (0, pad))
    x2d = flat.reshape(rows, c)  # metadata-only when pad == 0 and x is f32

    grid = (pl.cdiv(rows, block_rows),)
    block_bytes = block_rows * c * 4
    # 2 input + 2 output double-buffers plus headroom; clamp so it is safe on
    # every generation (v5e 16 MiB scoped default, v7x 64 MiB physical).
    vmem_limit = int(min(48 << 20, max(16 << 20, 4 * block_bytes + (4 << 20))))

    scale2d = pl.pallas_call(
        _mdecoder_scale_kernel,
        out_shape=jax.ShapeDtypeStruct((rows, c), jnp.float32),
        grid=grid,
        in_specs=[
            pl.BlockSpec((block_rows, c), lambda i: (i, 0)),
            pl.BlockSpec(memory_space=pltpu.SMEM),
            pl.BlockSpec(memory_space=pltpu.SMEM),
        ],
        out_specs=pl.BlockSpec((block_rows, c), lambda i: (i, 0)),
        compiler_params=pltpu.CompilerParams(
            dimension_semantics=("parallel",),
            vmem_limit_bytes=vmem_limit),
        cost_estimate=pl.CostEstimate(
            flops=2 * rows * c,
            transcendentals=rows * c,
            bytes_accessed=8 * rows * c),
    )(x2d, w_f32.reshape((1,)), b_f32.reshape((1,)))

    if pad:
        pmx_scale = scale2d.reshape(-1)[:total].reshape(orig_shape)
    else:
        pmx_scale = scale2d.reshape(orig_shape)
    return pmx_mean, pmx_scale


if __name__ == "__main__":
    key = jax.random.PRNGKey(0)
    kx, kw, kb, kx2, kx3 = jax.random.split(key, 5)

    # Deterministic Linear(1,1) parameters.
    w = jax.random.uniform(kw, (), minval=-1.0, maxval=1.0, dtype=jnp.float32)
    b = jax.random.uniform(kb, (), minval=-1.0, maxval=1.0, dtype=jnp.float32)

    # 1) Small batch of scalar inputs, shape [N, 1] (Linear(1,1) expects last
    #    dim 1) -> exercises the XLA fast path.
    x = jax.random.normal(kx, (16, 1), dtype=jnp.float32)
    m1, s1 = mdecoder_forward(x, w, b)
    jax.block_until_ready((m1, s1))
    assert m1.shape == x.shape and s1.shape == x.shape
    assert jnp.allclose(m1, x), "pmx_mean mismatch (small)"
    assert jnp.allclose(s1, jnp.exp(x * w + b), rtol=1e-5, atol=1e-6), \
        "pmx_scale mismatch (small)"

    # 2) Force the Pallas path on an aligned batch: 8192 elems -> [16, 512]
    #    zero-copy layout, block_rows=8 -> 2-step pipelined grid.
    x2 = jax.random.normal(kx2, (8192, 1), dtype=jnp.float32)
    m2, s2 = mdecoder_forward(x2, w, b, force_pallas=True)
    jax.block_until_ready((m2, s2))
    assert jnp.allclose(m2, x2), "pmx_mean mismatch (pallas aligned)"
    assert jnp.allclose(s2, jnp.exp(x2 * w + b), rtol=1e-5, atol=1e-6), \
        "pmx_scale mismatch (pallas aligned)"

    # 3) Force the Pallas path on a misaligned batch (exercises the padded
    #    fallback: 1000 elems -> [8, 128] with 24 pad elements).
    x3 = jax.random.normal(kx3, (1000, 1), dtype=jnp.float32)
    m3, s3 = mdecoder_forward(x3, w, b, force_pallas=True)
    jax.block_until_ready((m3, s3))
    assert jnp.allclose(m3, x3), "pmx_mean mismatch (pallas padded)"
    assert jnp.allclose(s3, jnp.exp(x3 * w + b), rtol=1e-5, atol=1e-6), \
        "pmx_scale mismatch (pallas padded)"

    print("KERNEL_OK")
</pallas_src>

<mosaic_0001>
module attributes {stable_mosaic.version = 11 : i64} {
  func.func @_mdecoder_scale_kernel(%arg0: i32, %arg1: memref<8x512xf32, #tpu.memory_space<vmem>>, %arg2: memref<1xf32, #tpu.memory_space<smem>>, %arg3: memref<1xf32, #tpu.memory_space<smem>>, %arg4: memref<8x512xf32, #tpu.memory_space<vmem>>) attributes {dimension_semantics = [#tpu.dimension_semantics<parallel>], iteration_bounds = array<i64: 2>, scalar_prefetch = 0 : i64, scratch_operands = 0 : i64, tpu.core_type = #tpu.core_type<tc>, window_params = [{transform_indices = @transform_0, window_bounds = array<i64: 8, 512>}, {transform_indices = @transform_1, window_bounds = array<i64: 1>}, {transform_indices = @transform_2, window_bounds = array<i64: 1>}, {transform_indices = @transform_3, window_bounds = array<i64: 8, 512>}]} {
    %c0 = arith.constant 0 : index
    %c0_0 = arith.constant 0 : index
    %0 = vector.load %arg1[%c0, %c0_0] : memref<8x512xf32, #tpu.memory_space<vmem>>, vector<8x512xf32>
    %c0_1 = arith.constant 0 : index
    %1 = memref.load %arg2[%c0_1] : memref<1xf32, #tpu.memory_space<smem>>
    %2 = vector.broadcast %1 : f32 to vector<8x512xf32>
    %3 = arith.mulf %0, %2 : vector<8x512xf32>
    %c0_2 = arith.constant 0 : index
    %4 = memref.load %arg3[%c0_2] : memref<1xf32, #tpu.memory_space<smem>>
    %5 = vector.broadcast %4 : f32 to vector<8x512xf32>
    %6 = arith.addf %3, %5 : vector<8x512xf32>
    %7 = math.exp %6 : vector<8x512xf32>
    %c0_3 = arith.constant 0 : index
    %c0_4 = arith.constant 0 : index
    %8 = vector.load %arg4[%c0_3, %c0_4] : memref<8x512xf32, #tpu.memory_space<vmem>>, vector<8x512xf32>
    tpu.vector_store %arg4[%c0_3, %c0_4], %7 {strides = array<i32>} : memref<8x512xf32, #tpu.memory_space<vmem>>, vector<8x512xf32>,
    return
  }
  func.func @transform_0(%arg0: i32) -> (i32, i32) {
    %c0_i32 = arith.constant 0 : i32
    %c0_i32_0 = arith.constant 0 : i32
    return %arg0, %c0_i32 : i32, i32
  }
  func.func @transform_1(%arg0: i32) -> i32 {
    %c0_i32 = arith.constant 0 : i32
    %c0_i32_0 = arith.constant 0 : i32
    return %c0_i32 : i32
  }
  func.func @transform_2(%arg0: i32) -> i32 {
    %c0_i32 = arith.constant 0 : i32
    %c0_i32_0 = arith.constant 0 : i32
    return %c0_i32 : i32
  }
  func.func @transform_3(%arg0: i32) -> (i32, i32) {
    %c0_i32 = arith.constant 0 : i32
    %c0_i32_0 = arith.constant 0 : i32
    return %arg0, %c0_i32 : i32, i32
  }
}

</mosaic_0001>

<llo_original>
// kernel: tpu_custom_call.1
$region0: #{tpu_custom_call.1}
  #allocation0 [shape = 'u32[]', space=smem, size = 0x4, offset = 0x4, fixed_abs, tag = 'smem constant byte address 0x4 - core index']
  #allocation1 [shape = 'u32[144,128]{1,0:T(1,128)}', space=vmem, size = 0x12000, scoped, tag = 'internal scratch']
  #allocation2 [shape = 'f32[1]{0:T(128)S(6)}', space=smem, size = 0x200, scoped, tag = 'scoped memory for tpu_custom_call.1']
  #allocation3 [shape = 'f32[1]{0:T(128)S(6)}', space=smem, size = 0x200, scoped, tag = 'scoped memory for tpu_custom_call.1']
  %s0 = inlined_call_operand.hbm [shape: f32[16,512], index: 0, kind: input, shape index: {}]
  %s1 = inlined_call_operand.<no memory space> [shape: f32[1], index: 1, kind: input, shape index: {}]
  %s2 = inlined_call_operand.<no memory space> [shape: f32[1], index: 2, kind: input, shape index: {}]
  %s3 = inlined_call_operand.hbm [shape: f32[16,512], index: 3, kind: output, shape index: {}]
  %s4 = sld [smem:[#allocation0]]
  $region49: #{tpu_custom_call.1} parent=0
    _
  %s6 = ssub.s32 1, %s4
  %s7 = scalar_select 0, %s6, %s4
  %8 = sst [smem:[#allocation2]] %s1
  %9 = sst [smem:[#allocation3]] %s2
  $region1: #{tpu_custom_call.1} parent=0
    #allocation4 [shape = 'u8[32768]{0}', space=vmem, size = 0x8000, scoped, tag = 'input window, operand 0']
    #allocation5 [shape = 's32[2]{0}', space=sflag, size = 0x8, scoped, tag = 'scoped memory for tpu_custom_call.1']
    #allocation6 [shape = 's32[2]{0}', space=sflag, size = 0x8, scoped, tag = 'scoped memory for tpu_custom_call.1']
    #allocation7 [shape = 'u8[32768]{0}', space=vmem, size = 0x8000, scoped, tag = 'output window, operand 0']
    %10 = vsyncpa [#allocation5], 0
    %s11 = scalar_lea.sflag [#allocation5], 1
    %12 = vsyncpa %s11, 0
    %13 = vsyncpa [#allocation6], 0
    %s14 = scalar_lea.sflag [#allocation6], 1
    %15 = vsyncpa %s14, 0
    loop: start=0, step=1, limit=4
    $region2: #{tpu_custom_call.1} parent=1 // loop_pre_header
      _
    $region3: #{tpu_custom_call.1} parent=1 // loop_header
      %s17 = sphi 0, %s21
      %p18 = scmp.ge.s32.totalorder %s17, 4
      %s27 = sphi 0, %s29
      %s30 = sphi 0, %s27
      %s31 = sphi 0, %s30
      %s47 = sphi 0, %s31
      %s51 = sphi 0, %s51
      %s53 = sphi 0, %s51
      %s54 = sphi 0, %s53
      %s68 = sphi 0, %s54
      %s72 = sphi 0, %s72
      %s74 = sphi 0, %s72
      %s75 = sphi 0, %s74
      %s89 = sphi 0, %s75
      %s95 = sphi 0, %s97
      %s98 = sphi 0, %s95
      %s99 = sphi 0, %s98
      %s115 = sphi 0, %s99
    $region4: #{tpu_custom_call.1} parent=1 // loop_header_branch
      %20 = sbr.rel (%p18) target = $region8
    $region5: #{tpu_custom_call.1} parent=1 // loop_body
      %s22 = ssub.s32 %s17, 1
      %s23 = ssub.s32 %s17, 2
      %s24 = sadd.s32 %s17, 1
      %s25 = ssub.s32 %s17, %s24
      %p26 = scmp.eq.s32.totalorder %s25, 0
      %s28 = sadd.s32 %s27, 1
      %s29 = scalar_select %p26, %s27, %s28
      %p32 = pneg %p26
      %p33 = scmp.eq.s32.totalorder %s17, 1
      %p34 = por %p32, %p33
      %p35 = scmp.ne.s32.totalorder %s27, %s30
      %p36 = scmp.eq.s32.totalorder %s17, 0
      %p37 = por %p35, %p36
      %p38 = scmp.ne.s32.totalorder %s27, %s30
      %p39 = scmp.eq.s32.totalorder %s22, 1
      %p40 = por %p38, %p39
      %p41 = scmp.ne.s32.totalorder %s30, %s31
      %p42 = scmp.eq.s32.totalorder %s22, 0
      %p43 = por %p41, %p42
      %p44 = scmp.ne.s32.totalorder %s30, %s31
      %p45 = scmp.eq.s32.totalorder %s23, 1
      %p46 = por %p44, %p45
      %p48 = scmp.ne.s32.totalorder %s31, %s47
      %p49 = scmp.eq.s32.totalorder %s23, 0
      %p50 = por %p48, %p49
      %s52 = sadd.s32 %s51, 1
      %p55 = scmp.eq.s32.totalorder %s17, 1
      %p56 = scmp.ne.s32.totalorder %s51, %s53
      %p57 = scmp.eq.s32.totalorder %s17, 0
      %p58 = por %p56, %p57
      %p59 = scmp.ne.s32.totalorder %s51, %s53
      %p60 = scmp.eq.s32.totalorder %s22, 1
      %p61 = por %p59, %p60
      %p62 = scmp.ne.s32.totalorder %s53, %s54
      %p63 = scmp.eq.s32.totalorder %s22, 0
      %p64 = por %p62, %p63
      %p65 = scmp.ne.s32.totalorder %s53, %s54
      %p66 = scmp.eq.s32.totalorder %s23, 1
      %p67 = por %p65, %p66
      %p69 = scmp.ne.s32.totalorder %s54, %s68
      %p70 = scmp.eq.s32.totalorder %s23, 0
      %p71 = por %p69, %p70
      %s73 = sadd.s32 %s72, 1
      %p76 = scmp.eq.s32.totalorder %s17, 1
      %p77 = scmp.ne.s32.totalorder %s72, %s74
      %p78 = scmp.eq.s32.totalorder %s17, 0
      %p79 = por %p77, %p78
      %p80 = scmp.ne.s32.totalorder %s72, %s74
      %p81 = scmp.eq.s32.totalorder %s22, 1
      %p82 = por %p80, %p81
      %p83 = scmp.ne.s32.totalorder %s74, %s75
      %p84 = scmp.eq.s32.totalorder %s22, 0
      %p85 = por %p83, %p84
      %p86 = scmp.ne.s32.totalorder %s74, %s75
      %p87 = scmp.eq.s32.totalorder %s23, 1
      %p88 = por %p86, %p87
      %p90 = scmp.ne.s32.totalorder %s75, %s89
      %p91 = scmp.eq.s32.totalorder %s23, 0
      %p92 = por %p90, %p91
      %s93 = ssub.s32 %s17, %s24
      %p94 = scmp.eq.s32.totalorder %s93, 0
      %s96 = sadd.s32 %s95, 1
      %s97 = scalar_select %p94, %s95, %s96
      %p100 = pneg %p94
      %p101 = scmp.eq.s32.totalorder %s17, 1
      %p102 = por %p100, %p101
      %p103 = scmp.ne.s32.totalorder %s95, %s98
      %p104 = scmp.eq.s32.totalorder %s17, 0
      %p105 = por %p103, %p104
      %p106 = scmp.ne.s32.totalorder %s95, %s98
      %p107 = scmp.eq.s32.totalorder %s22, 1
      %p108 = por %p106, %p107
      %p109 = scmp.ne.s32.totalorder %s98, %s99
      %p110 = scmp.eq.s32.totalorder %s22, 0
      %p111 = por %p109, %p110
      %p112 = scmp.ne.s32.totalorder %s98, %s99
      %p113 = scmp.eq.s32.totalorder %s23, 1
      %p114 = por %p112, %p113
      %p116 = scmp.ne.s32.totalorder %s99, %s115
      %p117 = scmp.eq.s32.totalorder %s23, 0
      %p118 = por %p116, %p117
      %p119 = scmp.le.s32.totalorder 1, %s17
      %p120 = scmp.lt.s32.totalorder %s17, 3
      %p121 = pnand %p119, %p120
      %p122 = pneg %p121
      // Predicated region
      $region9: #{tpu_custom_call.1} parent=5 // pred_check
        _
      $region10: #{tpu_custom_call.1} parent=5 // pred_check_branch
        %124 = sbr.rel (%p121) target = $region12
      $region11: #{tpu_custom_call.1} parent=5 // pred_region
        %s125 = ssub.s32 %s17, 1
        // Predicated region
        $region13: #{tpu_custom_call.1} parent=11 // pred_check
          %p126 = pneg %p64
        $region14: #{tpu_custom_call.1} parent=11 // pred_check_branch
          %128 = sbr.rel (%p126) target = $region16
        $region15: #{tpu_custom_call.1} parent=11 // pred_region
          _
        $region16: #{tpu_custom_call.1} parent=11 // pred_fallthru
          _
        // Predicated region
        $region17: #{tpu_custom_call.1} parent=11 // pred_check
          %p129 = pneg %p85
        $region18: #{tpu_custom_call.1} parent=11 // pred_check_branch
          %131 = sbr.rel (%p129) target = $region20
        $region19: #{tpu_custom_call.1} parent=11 // pred_region
          _
        $region20: #{tpu_custom_call.1} parent=11 // pred_fallthru
          _
      $region12: #{tpu_custom_call.1} parent=5 // pred_fallthru
        _
      %p132 = scmp.lt.s32.totalorder %s17, 2
      // Predicated region
      $region21: #{tpu_custom_call.1} parent=5 // pred_check
        %p133 = pneg %p132
      $region22: #{tpu_custom_call.1} parent=5 // pred_check_branch
        %135 = sbr.rel (%p133) target = $region24
      $region23: #{tpu_custom_call.1} parent=5 // pred_region
        // Predicated region
        $region25: #{tpu_custom_call.1} parent=23 // pred_check
          %p136 = pneg %p37
        $region26: #{tpu_custom_call.1} parent=23 // pred_check_branch
          %138 = sbr.rel (%p136) target = $region28
        $region27: #{tpu_custom_call.1} parent=23 // pred_region
          %s139 = sand.u32 %s27, 1
          %s140 = scalar_lea.sflag [#allocation5], %s139
          %s141 = sand.u32 %s27, 1
          %s142 = smul.addr %s141, 32
          %s143 = scalar_lea.vmem [#allocation4], %s142
          %s145 = ssub.s32 512, 512
          %146 = vsyncadd %s140, %s145
          %s147 = smul.addr %s17, 4
          %s148 = smul.addr %s147, 128
          %s149 = scalar_lea.hbm %s0, %s148
          %s151 = sshll.u32 %s143, 4
          %s152 = int_to_ptr.vmem [resolvable:$true] %s151
          %154 = dma.hbm_to_vmem [thread:$0]  %s149, 512, %s152, %s140
        $region28: #{tpu_custom_call.1} parent=23 // pred_fallthru
          _
      $region24: #{tpu_custom_call.1} parent=5 // pred_fallthru
        _
      %p155 = scmp.le.s32.totalorder 1, %s17
      %p156 = scmp.lt.s32.totalorder %s17, 3
      %p157 = pnand %p155, %p156
      %p158 = pneg %p157
      // Predicated region
      $region29: #{tpu_custom_call.1} parent=5 // pred_check
        _
      $region30: #{tpu_custom_call.1} parent=5 // pred_check_branch
        %160 = sbr.rel (%p157) target = $region32
      $region31: #{tpu_custom_call.1} parent=5 // pred_region
        %s161 = ssub.s32 %s17, 1
        %s162 = sand.u32 %s30, 1
        %s163 = scalar_lea.sflag [#allocation5], %s162
        %s164 = sand.u32 %s30, 1
        %s165 = smul.addr %s164, 32
        %s166 = scalar_lea.vmem [#allocation4], %s165
        // Predicated region
        $region33: #{tpu_custom_call.1} parent=31 // pred_check
          %p167 = pneg %p43
        $region34: #{tpu_custom_call.1} parent=31 // pred_check_branch
          %169 = sbr.rel (%p167) target = $region36
        $region35: #{tpu_custom_call.1} parent=31 // pred_region
          %170 = dma.done %s163, 512
        $region36: #{tpu_custom_call.1} parent=31 // pred_fallthru
          _
        %s171 = sand.u32 %s30, 1
        %s172 = scalar_lea.sflag [#allocation5], %s171
        %s173 = sand.u32 %s30, 1
        %s174 = smul.addr %s173, 32
        %s175 = scalar_lea.vmem [#allocation4], %s174
        %p176 = pneg %p43
        %p177 = pneg %p40
        %p178 = pneg %p64
        %p179 = pneg %p61
        %p180 = pneg %p85
        %p181 = pneg %p82
        %p182 = pneg %p111
        %p183 = pneg %p108
        %s184 = sand.u32 %s98, 1
        %s185 = scalar_lea.sflag [#allocation6], %s184
        %s186 = sand.u32 %s98, 1
        %s187 = smul.addr %s186, 32
        %s188 = scalar_lea.vmem [#allocation7], %s187
        %v189 = vld [vmem:[%s166] sm:$0xff]
        %v190 = vld [vmem:[%s166 + $0x8] sm:$0xff]
        %v191 = vld [vmem:[%s166 + $0x10] sm:$0xff]
        %v192 = vld [vmem:[%s166 + $0x18] sm:$0xff]
        %s193 = sld [smem:[#allocation2]]
        %v194 = vstv %s193
        %v195 = vmul.f32 %v189, %v194
        %v196 = vmul.f32 %v190, %v194
        %v197 = vmul.f32 %v191, %v194
        %v198 = vmul.f32 %v192, %v194
        %s199 = sld [smem:[#allocation3]]
        %v200 = vstv %s199
        %v201 = vadd.f32 %v195, %v200
        %v202 = vadd.f32 %v196, %v200
        %v203 = vadd.f32 %v197, %v200
        %v204 = vadd.f32 %v198, %v200
        %v205 = vmul.f32 %v201, 1.442695
        %v206 = vpow.pop %v205
        %v207 = vmul.f32 %v202, 1.442695
        %v208 = vpow.pop %v207
        %v209 = vmul.f32 %v203, 1.442695
        %v210 = vpow.pop %v209
        %v211 = vmul.f32 %v204, 1.442695
        %v212 = vpow.pop %v211
        %213 = vst [vmem:[%s188] sm:$0xff] %v206
        %214 = vst [vmem:[%s188 + $0x8] sm:$0xff] %v208
        %215 = vst [vmem:[%s188 + $0x10] sm:$0xff] %v210
        %216 = vst [vmem:[%s188 + $0x18] sm:$0xff] %v212
        %s217 = sand.u32 %s98, 1
        %s218 = scalar_lea.sflag [#allocation6], %s217
        %s219 = sand.u32 %s98, 1
        %s220 = smul.addr %s219, 32
        %s221 = scalar_lea.vmem [#allocation7], %s220
        // Predicated region
        $region37: #{tpu_custom_call.1} parent=31 // pred_check
          %p222 = pneg %p108
        $region38: #{tpu_custom_call.1} parent=31 // pred_check_branch
          %224 = sbr.rel (%p222) target = $region40
        $region39: #{tpu_custom_call.1} parent=31 // pred_region
          %s226 = ssub.s32 512, 512
          %227 = vsyncadd %s218, %s226
          %s228 = smul.addr %s22, 4
          %s229 = smul.addr %s228, 128
          %s230 = scalar_lea.hbm %s3, %s229
          %s232 = sshll.u32 %s221, 4
          %s233 = int_to_ptr.vmem [resolvable:$true] %s232
          %235 = dma.vmem_to_hbm [thread:$0]  %s233, 512, %s230, %s218
        $region40: #{tpu_custom_call.1} parent=31 // pred_fallthru
          _
      $region32: #{tpu_custom_call.1} parent=5 // pred_fallthru
        _
      %p236 = scmp.le.s32.totalorder 2, %s17
      // Predicated region
      $region41: #{tpu_custom_call.1} parent=5 // pred_check
        %p237 = pneg %p236
      $region42: #{tpu_custom_call.1} parent=5 // pred_check_branch
        %239 = sbr.rel (%p237) target = $region44
      $region43: #{tpu_custom_call.1} parent=5 // pred_region
        %s240 = ssub.s32 %s17, 2
        // Predicated region
        $region45: #{tpu_custom_call.1} parent=43 // pred_check
          %p241 = pneg %p114
        $region46: #{tpu_custom_call.1} parent=43 // pred_check_branch
          %243 = sbr.rel (%p241) target = $region48
        $region47: #{tpu_custom_call.1} parent=43 // pred_region
          %s244 = sand.u32 %s99, 1
          %s245 = scalar_lea.sflag [#allocation6], %s244
          %s246 = sand.u32 %s99, 1
          %s247 = smul.addr %s246, 32
          %s248 = scalar_lea.vmem [#allocation7], %s247
          %249 = dma.done %s245, 512
        $region48: #{tpu_custom_call.1} parent=43 // pred_fallthru
          _
      $region44: #{tpu_custom_call.1} parent=5 // pred_fallthru
        _
    $region6: #{tpu_custom_call.1} parent=1 // loop_footer
      %s21 = sadd.s32 1, %s17
    $region7: #{tpu_custom_call.1} parent=1 // loop_footer_branch
      %16 = sbr.rel target = $region3
    $region8: #{tpu_custom_call.1} parent=1 // loop_exit
      _
    %250 = vsyncpa [#allocation5], 1
    %s251 = scalar_lea.sflag [#allocation5], 1
    %252 = vsyncpa %s251, 1
    %253 = vsyncpa [#allocation6], 1
    %s254 = scalar_lea.sflag [#allocation6], 1
    %255 = vsyncpa %s254, 1

</llo_original>
